<compile_context>
chip_gen: v6e
topology: v6e:2x2x1
jax: 0.10.0
libtpu: 0.0.40
codegen_flags: <defaults>
</compile_context>

<pallas_src>
import jax
import jax.numpy as jnp
from jax.experimental import pallas as pl
from jax.experimental.pallas import tpu as pltpu


def _round_up(x, m):
    return (x + m - 1) // m * m


# ----------------------------- Pallas kernel -------------------------------

def headwise_classifier_kernel(x_ref, w_ref, b_ref, o_ref):
    # x_ref: (tile_r, Kg)     f32  -> cast to bf16 in-register (no HBM pass)
    # w_ref: (Kg, Ng_pad)     bf16 block-diagonal per-group classifier
    # b_ref: (1, Ng_pad)      f32
    # o_ref: (tile_r, Ng_pad) f32  (lane-dense, unmasked stores)
    x = x_ref[...].astype(jnp.bfloat16)
    acc = jnp.dot(x, w_ref[...], preferred_element_type=jnp.float32)  # MXU
    o_ref[...] = acc + b_ref[...]                                     # f32 bias


def headwise_classifier(x_rows, w_g, b_g, num_groups, *, max_tile_r=512,
                        vmem_budget_bytes=40 << 20):
    """x_rows: (R, H) f32; w_g: (Kg, Ng_pad) bf16; b_g: (1, Ng_pad) f32.

    H = num_groups * Kg.  Returns (R, num_groups * Ng_pad) f32 logits
    (padded columns / padded rows carry bias-only values and are sliced off
    by the caller).
    """
    R, H = x_rows.shape
    Kg, Ng_pad = w_g.shape
    assert H == num_groups * Kg

    # Balanced row tile (multiple of 8): bounds padding waste to <8 rows and
    # amortizes the ~0.35us per-grid-step overhead.
    num_row_tiles = pl.cdiv(R, max_tile_r)
    tile_r = _round_up(pl.cdiv(R, num_row_tiles), 8)

    # Shrink the tile if the double-buffered footprint would blow the VMEM
    # budget (v7x: 64 MiB physical; v5e: 16 MiB default scoped limit).
    def footprint(tr):
        return 2 * (tr * Kg * 4            # x block (f32), double-buffered
                    + Kg * Ng_pad * 2      # weight (bf16)
                    + 8 * Ng_pad * 4       # bias (sublane-padded)
                    + tr * Ng_pad * 4)     # output block (f32)
    while tile_r > 8 and footprint(tile_r) > vmem_budget_bytes:
        tile_r = _round_up(tile_r // 2, 8)

    R_pad = _round_up(R, tile_r)
    if R_pad != R:
        x_rows = jnp.pad(x_rows, ((0, R_pad - R), (0, 0)))

    cost = pl.CostEstimate(
        flops=2 * R_pad * H * Ng_pad,
        transcendentals=0,
        bytes_accessed=(R_pad * H * 4 + Kg * Ng_pad * 2
                        + R_pad * num_groups * Ng_pad * 4))

    out = pl.pallas_call(
        headwise_classifier_kernel,
        out_shape=jax.ShapeDtypeStruct((R_pad, num_groups * Ng_pad),
                                       jnp.float32),
        grid_spec=pltpu.PrefetchScalarGridSpec(
            num_scalar_prefetch=0,
            grid=(R_pad // tile_r, num_groups),
            in_specs=[
                pl.BlockSpec((tile_r, Kg), lambda i, g: (i, g)),   # K-slice
                pl.BlockSpec((Kg, Ng_pad), lambda i, g: (0, 0)),   # shared w
                pl.BlockSpec((1, Ng_pad), lambda i, g: (0, 0)),    # shared b
            ],
            out_specs=pl.BlockSpec((tile_r, Ng_pad), lambda i, g: (i, g)),
        ),
        compiler_params=pltpu.CompilerParams(
            # Row tiles and head groups are independent -> feed both v7x TCs.
            dimension_semantics=("parallel", "parallel"),
            # Raise v5e's 16 MiB default; stay well under v7x's 64 MiB.
            vmem_limit_bytes=int(min(max(2 * footprint(tile_r), 32 << 20),
                                     48 << 20)),
        ),
        cost_estimate=cost,
    )(x_rows, w_g, b_g)
    return out[:R]


# --------------------- classifier prep (hoisted, one-time) ------------------

def _pick_head_group(num_heads, head_dim, num_labels):
    """Smallest head-group size that keeps K-slices and output lane-legal.

    Smaller groups waste fewer block-diagonal FLOPs; a group must evenly
    divide num_heads, give a lane-dense output (gh*C >= 128), and a legal
    K-slice (gh*Dh % 128 == 0) unless it is the single full-width group.
    """
    for gh in range(1, num_heads + 1):
        if num_heads % gh:
            continue
        if gh != num_heads:
            if gh * num_labels < 128:
                continue
            if (gh * head_dim) % 128:
                continue
        return gh
    return num_heads


def build_group_classifier(cls_w, cls_b, heads_per_group):
    """Fold the shared per-head classifier into one per-group block-diag weight.

    cls_w: (Dh, C), cls_b: (1, C) -> w: (gh*Dh, Ng_pad) bf16, b: (1, Ng_pad)
    f32 with Ng_pad a multiple of 128 (lane-dense kernel output).  Column
    block h*C:(h+1)*C holds (within-group) head h's logits.
    """
    Dh, C = cls_w.shape
    Kg = heads_per_group * Dh
    Ng = heads_per_group * C
    Ng_pad = _round_up(max(Ng, 128), 128)

    eye = jnp.eye(heads_per_group, dtype=jnp.float32)
    w = jnp.einsum("gh,dc->gdhc", eye, cls_w.astype(jnp.float32))
    w = w.reshape(Kg, Ng)
    w = jnp.pad(w, ((0, 0), (0, Ng_pad - Ng)))
    b = jnp.tile(cls_b.reshape(1, -1).astype(jnp.float32), (1, heads_per_group))
    b = jnp.pad(b, ((0, 0), (0, Ng_pad - Ng)))
    return w.astype(jnp.bfloat16), b


# ------------------------- synthetic "backbone" ----------------------------
# TODO(synk): the real module uses a pretrained HF transformer backbone; here
# we use a small deterministic stand-in that still consumes input_ids and
# attention_mask and emits a list of hidden states (num_hidden_layers + 1).

def synthetic_backbone(input_ids, attention_mask, emb_table, layer_ws):
    mask = attention_mask[..., None].astype(jnp.float32)
    h = emb_table[input_ids] * mask                # (B, S, H)
    hidden_states = [h]
    for Wl in layer_ws:
        h = jnp.tanh(h @ Wl) * mask
        hidden_states.append(h)
    return hidden_states


# ------------------------------ full forward -------------------------------

def headwise_forward(input_ids, attention_mask, params, cls_pack):
    w_g, b_g, num_heads, heads_per_group, num_labels = cls_pack
    hidden_states = synthetic_backbone(
        input_ids, attention_mask, params["emb"], params["layers"])

    B, S, H = hidden_states[0].shape
    G = num_heads // heads_per_group
    Ng_pad = w_g.shape[1]

    per_layer = []
    for h in hidden_states:
        # Feed the f32 hidden state straight to the kernel (reshape is free;
        # no stack, no separate bf16 materialization in HBM).
        rows = h.reshape(B * S, H)
        out = headwise_classifier(rows, w_g, b_g, G)      # (B*S, G*Ng_pad) f32
        out = out.reshape(B, S, G, Ng_pad)[..., :heads_per_group * num_labels]
        out = out.reshape(B, S, num_heads, num_labels)
        per_layer.append(jnp.transpose(out, (2, 0, 1, 3)))  # (nh, B, S, C)

    # Stacked (NL, nh, B, S, C); equivalent to the PyTorch list
    # [classifier(chunk(l, h)) for l in layers for h in heads].
    return jnp.stack(per_layer, axis=0)


# --------------------------------- main -------------------------------------

if __name__ == "__main__":
    # args.embed_size = 'xsmall' -> hidden = 32; small demo shapes.
    # NOTE: with H=32 the lane axis is only 32/128 utilized; for throughput at
    # these tiny widths one could fold 4 rows into one 128-wide lane row, but
    # it is skipped here to keep the indexing simple and exact.
    B, S, H = 2, 8, 32
    num_heads = 4
    Dh = H // num_heads
    num_labels = 2
    num_hidden_layers = 2          # backbone emits num_hidden_layers + 1 states
    vocab = 50

    key = jax.random.PRNGKey(0)
    k_emb, k_cls, k_ids, *k_layers = jax.random.split(key, 3 + num_hidden_layers)

    params = {
        "emb": 0.02 * jax.random.normal(k_emb, (vocab, H), jnp.float32),
        "layers": [0.1 * jax.random.normal(kl, (H, H), jnp.float32)
                   for kl in k_layers],
        "cls_w": 0.05 * jax.random.normal(k_cls, (Dh, num_labels), jnp.float32),
        "cls_b": jnp.zeros((1, num_labels), jnp.float32),
    }

    # Hoisted one-time classifier prep (not in the per-forward path).
    heads_per_group = _pick_head_group(num_heads, Dh, num_labels)
    w_g, b_g = build_group_classifier(params["cls_w"], params["cls_b"],
                                      heads_per_group)
    cls_pack = (w_g, b_g, num_heads, heads_per_group, num_labels)

    input_ids = jax.random.randint(k_ids, (B, S), 0, vocab)
    attention_mask = jnp.ones((B, S), jnp.int32)

    logits = headwise_forward(input_ids, attention_mask, params, cls_pack)
    logits = jax.block_until_ready(logits)            # (NL, nh, B, S, C)

    # Reference check in plain JAX (same chunk + linear semantics, with the
    # same bf16 rounding of input/weight as the kernel, f32 accumulation).
    hs = synthetic_backbone(input_ids, attention_mask,
                            params["emb"], params["layers"])
    w_bf = params["cls_w"].astype(jnp.bfloat16).astype(jnp.float32)
    ok = True
    for l in range(len(hs)):
        for hd in range(num_heads):
            chunk = hs[l][:, :, hd * Dh:(hd + 1) * Dh]
            chunk = chunk.astype(jnp.bfloat16).astype(jnp.float32)
            ref = chunk @ w_bf + params["cls_b"][0]
            ok &= bool(jnp.allclose(logits[l, hd], ref, atol=2e-4, rtol=2e-3))

    assert ok, "Pallas head-wise classifier mismatch vs reference"
    print("KERNEL_OK")
</pallas_src>

<mosaic_0001>
module attributes {stable_mosaic.version = 11 : i64} {
  func.func @headwise_classifier_kernel(%arg0: i32, %arg1: i32, %arg2: memref<16x32xf32, #tpu.memory_space<vmem>>, %arg3: memref<32x128xbf16, #tpu.memory_space<vmem>>, %arg4: memref<1x128xf32, #tpu.memory_space<vmem>>, %arg5: memref<16x128xf32, #tpu.memory_space<vmem>>) attributes {dimension_semantics = [#tpu.dimension_semantics<parallel>, #tpu.dimension_semantics<parallel>], iteration_bounds = array<i64: 1, 1>, scalar_prefetch = 0 : i64, scratch_operands = 0 : i64, tpu.core_type = #tpu.core_type<tc>, window_params = [{transform_indices = @transform_0, window_bounds = array<i64: 16, 32>}, {pipeline_mode = #tpu.pipeline_mode<synchronous>, transform_indices = @transform_1, window_bounds = array<i64: 32, 128>}, {pipeline_mode = #tpu.pipeline_mode<synchronous>, transform_indices = @transform_2, window_bounds = array<i64: 1, 128>}, {transform_indices = @transform_3, window_bounds = array<i64: 16, 128>}]} {
    %c0 = arith.constant 0 : index
    %c0_0 = arith.constant 0 : index
    %0 = vector.load %arg2[%c0, %c0_0] : memref<16x32xf32, #tpu.memory_space<vmem>>, vector<16x32xf32>
    %1 = arith.truncf %0 : vector<16x32xf32> to vector<16x32xbf16>
    %c0_1 = arith.constant 0 : index
    %c0_2 = arith.constant 0 : index
    %2 = vector.load %arg3[%c0_1, %c0_2] : memref<32x128xbf16, #tpu.memory_space<vmem>>, vector<32x128xbf16>
    %cst = arith.constant dense<0.000000e+00> : vector<16x128xf32>
    %3 = tpu.matmul %1, %2, %cst {dimension_numbers = #tpu.dot_dimension_numbers<[1], [0], [0], [1], [0, 0, 1, 1], [], []>} : vector<16x32xbf16>, vector<32x128xbf16>, vector<16x128xf32> -> vector<16x128xf32>
    %c0_3 = arith.constant 0 : index
    %c0_4 = arith.constant 0 : index
    %4 = vector.load %arg4[%c0_3, %c0_4] : memref<1x128xf32, #tpu.memory_space<vmem>>, vector<1x128xf32>
    %5 = vector.broadcast %4 : vector<1x128xf32> to vector<16x128xf32>
    %6 = arith.addf %3, %5 : vector<16x128xf32>
    %c0_5 = arith.constant 0 : index
    %c0_6 = arith.constant 0 : index
    %7 = vector.load %arg5[%c0_5, %c0_6] : memref<16x128xf32, #tpu.memory_space<vmem>>, vector<16x128xf32>
    tpu.vector_store %arg5[%c0_5, %c0_6], %6 {strides = array<i32>} : memref<16x128xf32, #tpu.memory_space<vmem>>, vector<16x128xf32>,
    return
  }
  func.func @transform_0(%arg0: i32, %arg1: i32) -> (i32, i32) {
    %c0_i32 = arith.constant 0 : i32
    return %arg0, %arg1 : i32, i32
  }
  func.func @transform_1(%arg0: i32, %arg1: i32) -> (i32, i32) {
    %c0_i32 = arith.constant 0 : i32
    %c0_i32_0 = arith.constant 0 : i32
    %c0_i32_1 = arith.constant 0 : i32
    return %c0_i32, %c0_i32_0 : i32, i32
  }
  func.func @transform_2(%arg0: i32, %arg1: i32) -> (i32, i32) {
    %c0_i32 = arith.constant 0 : i32
    %c0_i32_0 = arith.constant 0 : i32
    %c0_i32_1 = arith.constant 0 : i32
    return %c0_i32, %c0_i32_0 : i32, i32
  }
  func.func @transform_3(%arg0: i32, %arg1: i32) -> (i32, i32) {
    %c0_i32 = arith.constant 0 : i32
    return %arg0, %arg1 : i32, i32
  }
}

</mosaic_0001>

<llo_original>
// kernel: tpu_custom_call.1
$region0: #{tpu_custom_call.1}
  #allocation0 [shape = 'u32[]', space=smem, size = 0x4, offset = 0x4, fixed_abs, tag = 'smem constant byte address 0x4 - core index']
  #allocation1 [shape = 'u32[144,128]{1,0:T(1,128)}', space=vmem, size = 0x12000, scoped, tag = 'internal scratch']
  %s0 = inlined_call_operand.hbm [shape: f32[16,32], index: 0, kind: input, shape index: {}]
  %s1 = inlined_call_operand.hbm [shape: bf16[32,128], index: 1, kind: input, shape index: {}]
  %s2 = inlined_call_operand.vmem [shape: f32[1,128], index: 2, kind: input, shape index: {}]
  %s3 = inlined_call_operand.hbm [shape: f32[16,128], index: 3, kind: output, shape index: {}]
  %s4 = sld [smem:[#allocation0]]
  $region30: #{tpu_custom_call.1} parent=0
    _
  %s6 = ssub.s32 1, %s4
  %s7 = scalar_select 0, %s6, %s4
  $region1: #{tpu_custom_call.1} parent=0
    #allocation2 [shape = 'u8[8192]{0}', space=vmem, size = 0x2000, scoped, tag = 'input window, operand 0, single buffered']
    #allocation3 [shape = 's32[1]{0}', space=sflag, size = 0x4, scoped, tag = 'scoped memory for tpu_custom_call.1']
    #allocation4 [shape = 's32[1]{0}', space=sflag, size = 0x4, scoped, tag = 'scoped memory for tpu_custom_call.1']
    #allocation5 [shape = 'u8[8192]{0}', space=vmem, size = 0x2000, scoped, tag = 'input window, operand 1, single buffered']
    #allocation6 [shape = 's32[1]{0}', space=sflag, size = 0x4, scoped, tag = 'scoped memory for tpu_custom_call.1']
    #allocation7 [shape = 'u8[8192]{0}', space=vmem, size = 0x2000, scoped, tag = 'output window, operand 0, single buffered']
    %8 = vsyncpa [#allocation3], 0
    %9 = vsyncpa [#allocation6], 0
    %10 = vsyncpa [#allocation4], 0
    // Predicated region
    $region2: #{tpu_custom_call.1} parent=1 // pred_check
      _
    $region3: #{tpu_custom_call.1} parent=1 // pred_check_branch
      %12 = sbr.rel (0) target = $region5
    $region4: #{tpu_custom_call.1} parent=1 // pred_region
      %s14 = ssub.s32 256, 256
      %15 = vsyncadd [#allocation3], %s14
      %s16 = sshll.u32 [#allocation2], 4
      %s17 = int_to_ptr.vmem [resolvable:$true] %s16
      %22 = dma.hbm_to_vmem [thread:$0]  %s0, 256, %s17, [#allocation3], 128, 128, 8
    $region5: #{tpu_custom_call.1} parent=1 // pred_fallthru
      _
    // Predicated region
    $region6: #{tpu_custom_call.1} parent=1 // pred_check
      _
    $region7: #{tpu_custom_call.1} parent=1 // pred_check_branch
      %24 = sbr.rel (0) target = $region9
    $region8: #{tpu_custom_call.1} parent=1 // pred_region
      %s26 = ssub.s32 256, 256
      %27 = vsyncadd [#allocation6], %s26
      %s28 = sshll.u32 [#allocation5], 4
      %s29 = int_to_ptr.vmem [resolvable:$true] %s28
      %34 = dma.hbm_to_vmem [thread:$0]  %s1, 256, %s29, [#allocation6], 64, 64, 4
    $region9: #{tpu_custom_call.1} parent=1 // pred_fallthru
      _
    // Predicated region
    $region10: #{tpu_custom_call.1} parent=1 // pred_check
      _
    $region11: #{tpu_custom_call.1} parent=1 // pred_check_branch
      %36 = sbr.rel (0) target = $region13
    $region12: #{tpu_custom_call.1} parent=1 // pred_region
      _
    $region13: #{tpu_custom_call.1} parent=1 // pred_fallthru
      _
    // Predicated region
    $region14: #{tpu_custom_call.1} parent=1 // pred_check
      _
    $region15: #{tpu_custom_call.1} parent=1 // pred_check_branch
      %38 = sbr.rel (0) target = $region17
    $region16: #{tpu_custom_call.1} parent=1 // pred_region
      %39 = dma.done [#allocation3], 256
    $region17: #{tpu_custom_call.1} parent=1 // pred_fallthru
      _
    // Predicated region
    $region18: #{tpu_custom_call.1} parent=1 // pred_check
      _
    $region19: #{tpu_custom_call.1} parent=1 // pred_check_branch
      %41 = sbr.rel (0) target = $region21
    $region20: #{tpu_custom_call.1} parent=1 // pred_region
      %42 = dma.done [#allocation6], 256
    $region21: #{tpu_custom_call.1} parent=1 // pred_fallthru
      _
    %v44 = vld [vmem:[#allocation2] sm:$0xff]
    %v45 = vld [vmem:[#allocation2 + $0x8] sm:$0xff]
    %v46 = vpack.c.bf16 %v45, %v44
    %v47 = vld [vmem:[#allocation5] sm:$0xf]
    %v48 = vld [vmem:[#allocation5 + $0x4] sm:$0xf]
    %v49 = vld [vmem:[#allocation5 + $0x8] sm:$0xf]
    %v50 = vld [vmem:[#allocation5 + $0xc] sm:$0xf]
    %v51 = vld [vmem:[%s2] sm:$0x1]
    %v53 = vlaneseq
    %v54 = vshrl.u32 %v53, 7
    %v55 = vsub.s32 0, %v54
    %v56 = vrot.slane %v51, %v55
    %v62 = vunpack.c.l.b16 %v47
    %v63 = vunpack.c.l.b16 %v48
    %v64 = vunpack.c.l.b16 %v49
    %v65 = vunpack.c.l.b16 %v50
    %v66 = vpack.c.b16 %v63, %v62
    %v67 = vpack.c.b16 %v65, %v64
    %vm70 = vcmask 261120
    %v72 = vsel %vm70, %v46, 0
    %74 = vmatprep.subr.bf16.mxu0 0
    %75 = vmatpush1.bf16.msra.mxu0 0
    %76 = vmatprep.subr.bf16.mxu0 0
    %77 = vmatpush1.bf16.msra.mxu0 0
    %78 = vmatprep.subr.bf16.mxu0 0
    %79 = vmatpush1.bf16.msra.mxu0 0
    %80 = vmatprep.subr.bf16.mxu0 0
    %81 = vmatpush1.bf16.msra.mxu0 0
    %82 = vmatprep.subr.bf16.mxu0 0
    %83 = vmatpush1.bf16.msra.mxu0 0
    %84 = vmatprep.subr.bf16.mxu0 0
    %85 = vmatpush1.bf16.msra.mxu0 0
    %86 = vmatprep.subr.bf16.mxu0 0
    %87 = vmatpush1.bf16.msra.mxu0 %v67
    %88 = vmatprep.subr.bf16.mxu0 0
    %89 = vmatpush1.bf16.msra.mxu0 %v66
    %90 = vmatprep.subr.bf16.mxu0 0
    %91 = vmatpush2.bf16.msra.mxu0 0
    %92 = vmatprep.subr.bf16.mxu0 0
    %93 = vmatpush2.bf16.msra.mxu0 0
    %94 = vmatprep.subr.bf16.mxu0 0
    %95 = vmatpush2.bf16.msra.mxu0 0
    %96 = vmatprep.subr.bf16.mxu0 0
    %97 = vmatpush2.bf16.msra.mxu0 0
    %98 = vmatprep.subr.bf16.mxu0 0
    %99 = vmatpush2.bf16.msra.mxu0 0
    %100 = vmatprep.subr.bf16.mxu0 0
    %101 = vmatpush2.bf16.msra.mxu0 0
    %102 = vmatprep.subr.bf16.mxu0 0
    %103 = vmatpush2.bf16.msra.mxu0 0
    %104 = vmatprep.subr.bf16.mxu0 0
    %105 = vmatpush2.bf16.msra.mxu0 0
    %106 = vmatprep.mubr.bf16.mxu0 0
    %107 = vmatmul.mubr.bf16.gmra.mxu0 %v72
    %v108 = vpop.f32.mrf.mxu0
    %v109 = vadd.f32 %v56, %v108
    %v110 = vpop.f32.mrf.mxu0
    %v111 = vpop.f32.mrf.mxu0
    %v112 = vadd.f32 %v56, %v111
    %v113 = vpop.f32.mrf.mxu0
    %114 = vdwg.mxu0
    %115 = vst [vmem:[#allocation7] sm:$0xff] %v109
    %116 = vst [vmem:[#allocation7 + $0x8] sm:$0xff] %v112
    // Predicated region
    $region22: #{tpu_custom_call.1} parent=1 // pred_check
      _
    $region23: #{tpu_custom_call.1} parent=1 // pred_check_branch
      %118 = sbr.rel (0) target = $region25
    $region24: #{tpu_custom_call.1} parent=1 // pred_region
      %s120 = ssub.s32 256, 256
      %121 = vsyncadd [#allocation4], %s120
      %s122 = sshll.u32 [#allocation7], 4
      %s123 = int_to_ptr.vmem [resolvable:$true] %s122
      %128 = dma.vmem_to_hbm [thread:$0]  %s123, 256, %s3, [#allocation4], 128, 128, 8
    $region25: #{tpu_custom_call.1} parent=1 // pred_fallthru
      _
    // Predicated region
    $region26: #{tpu_custom_call.1} parent=1 // pred_check
      _
    $region27: #{tpu_custom_call.1} parent=1 // pred_check_branch
      %130 = sbr.rel (0) target = $region29
    $region28: #{tpu_custom_call.1} parent=1 // pred_region
      %131 = dma.done [#allocation4], 256
    $region29: #{tpu_custom_call.1} parent=1 // pred_fallthru
      _
    %132 = vsyncpa [#allocation3], 1
    %133 = vsyncpa [#allocation6], 1
    %134 = vsyncpa [#allocation4], 1

</llo_original>
